<compile_context>
chip_gen: v6e
topology: v6e:2x2x1
jax: 0.10.0
libtpu: 0.0.40
codegen_flags: <defaults>
</compile_context>

<pallas_src>
import jax
import jax.numpy as jnp
import numpy as np
from jax.experimental import pallas as pl
from jax.experimental.pallas import tpu as pltpu


_LANE = 128        # full vreg lane width -> unmasked, lane-dense vector stores
_SUBLANE = 8
_TILE_ROWS = 4096  # (4096, 128) f32 block = 2 MiB; ~8 MiB resident w/ dbl-buffered in+out


def _copy_kernel(x_ref, o_ref):
    # Pure pass-through on the VPU; with input/output aliasing this is the
    # minimal legal body (one vld + one vst per vreg of the block).
    o_ref[...] = x_ref[...]


def _tiled_copy(x2: jax.Array) -> jax.Array:
    """Lane-dense copy of a (rows, 128) slab via Pallas."""
    rows, lane = x2.shape

    if rows <= _TILE_ROWS:
        # Small slab: single full-array block. Last two dims equal the full
        # array dims, so the (8,128) constraint is trivially satisfied.
        return pl.pallas_call(
            _copy_kernel,
            out_shape=jax.ShapeDtypeStruct((rows, lane), x2.dtype),
            in_specs=[pl.BlockSpec((rows, lane), lambda: (0, 0))],
            out_specs=pl.BlockSpec((rows, lane), lambda: (0, 0)),
            input_output_aliases={0: 0},
        )(x2)

    # Large slab: tiled, double-buffered, megacore-shardable copy. The grid
    # uses cdiv so a ragged final block is masked by Pallas instead of forcing
    # a whole-array VMEM block.
    grid = (pl.cdiv(rows, _TILE_ROWS),)
    return pl.pallas_call(
        _copy_kernel,
        out_shape=jax.ShapeDtypeStruct((rows, lane), x2.dtype),
        grid=grid,
        in_specs=[pl.BlockSpec((_TILE_ROWS, lane), lambda i: (i, 0))],
        out_specs=pl.BlockSpec((_TILE_ROWS, lane), lambda i: (i, 0)),
        input_output_aliases={0: 0},
        compiler_params=pltpu.CompilerParams(
            dimension_semantics=("parallel",)),
    )(x2)


def pallas_identity(x: jax.Array) -> jax.Array:
    """Identity implemented as a Pallas TPU kernel.

    Reshapes to a lane-dense (rows, 128) slab (padding if needed), aliases
    input->output, and tiles + pipelines the copy when the slab is large.
    """
    n = x.size
    if n == 0:
        return x

    if n % _LANE == 0:
        rows = n // _LANE
        y2 = _tiled_copy(x.reshape(rows, _LANE))
        return y2.reshape(x.shape)

    # Sizes not divisible by 128: flatten, pad to a multiple of 8*128, run the
    # same lane-dense tiled copy, then slice back. Avoids masked partial
    # stores in the original (narrow last-dim) layout and avoids whole-array
    # VMEM blocks.
    pad_unit = _SUBLANE * _LANE
    n_pad = ((n + pad_unit - 1) // pad_unit) * pad_unit
    flat = jnp.pad(x.reshape(-1), (0, n_pad - n))
    y2 = _tiled_copy(flat.reshape(n_pad // _LANE, _LANE))
    return y2.reshape(-1)[:n].reshape(x.shape)


class VNet:
    """JAX mirror of the (stub) PyTorch VNet."""

    def __init__(self):
        # Reference __init__ defines no parameters.
        pass

    def forward(self, *inputs):
        # Reference forward body is `pass` -> returns None (exact semantics).
        # TODO(synk): reference module has an empty forward; a real V-Net
        # conv encoder/decoder would be lowered as MXU im2col/implicit-GEMM
        # kernels, but there is nothing to lower here.
        return None

    __call__ = forward


if __name__ == "__main__":
    key = jax.random.PRNGKey(0)

    # --- Primary demo input (small, NCHW, divisible by 128) ----------------
    x = jax.random.normal(key, (2, 4, 16, 16), dtype=jnp.float32)
    x_host = np.asarray(x)                 # host copy BEFORE the aliasing call
    y = pallas_identity(x)
    jax.block_until_ready(y)
    assert y.shape == x_host.shape and y.dtype == jnp.float32
    assert np.array_equal(np.asarray(y), x_host)

    # --- Ragged / non-128-divisible path (padded lane-dense copy) ----------
    k2 = jax.random.PRNGKey(1)
    x_odd = jax.random.normal(k2, (3, 5, 7), dtype=jnp.float32)  # 105 elems
    x_odd_host = np.asarray(x_odd)
    y_odd = pallas_identity(x_odd)
    jax.block_until_ready(y_odd)
    assert np.array_equal(np.asarray(y_odd), x_odd_host)

    # --- Tiled grid path with a ragged last block (cdiv masking) -----------
    k3 = jax.random.PRNGKey(2)
    x_big = jax.random.normal(k3, (10, 16, 64, 128), dtype=jnp.float32)  # 10240 rows -> 3 tiles
    x_big_host = np.asarray(x_big)
    y_big = pallas_identity(x_big)
    jax.block_until_ready(y_big)
    assert np.array_equal(np.asarray(y_big), x_big_host)

    # Semantics check: VNet.forward returns None, exactly like the PyTorch stub.
    model = VNet()
    out = model(x_host)
    assert out is None

    print("KERNEL_OK")
</pallas_src>

<mosaic_0001>
module attributes {stable_mosaic.version = 11 : i64} {
  func.func @_copy_kernel(%arg0: memref<16x128xf32, #tpu.memory_space<vmem>>, %arg1: memref<16x128xf32, #tpu.memory_space<vmem>>) attributes {dimension_semantics = [], scalar_prefetch = 0 : i64, scratch_operands = 0 : i64, tpu.core_type = #tpu.core_type<tc>} {
    %c0 = arith.constant 0 : index
    %c0_0 = arith.constant 0 : index
    %0 = vector.load %arg0[%c0, %c0_0] : memref<16x128xf32, #tpu.memory_space<vmem>>, vector<16x128xf32>
    %c0_1 = arith.constant 0 : index
    %c0_2 = arith.constant 0 : index
    %1 = vector.load %arg1[%c0_1, %c0_2] : memref<16x128xf32, #tpu.memory_space<vmem>>, vector<16x128xf32>
    tpu.vector_store %arg1[%c0_1, %c0_2], %0 {strides = array<i32>} : memref<16x128xf32, #tpu.memory_space<vmem>>, vector<16x128xf32>,
    return
  }
}

</mosaic_0001>

<llo_original>
// kernel: tpu_custom_call.1
$region0: #{tpu_custom_call.1}
  #allocation0 [shape = 'u32[]', space=smem, size = 0x4, offset = 0x4, fixed_abs, tag = 'smem constant byte address 0x4 - core index']
  #allocation1 [shape = 'u32[144,128]{1,0:T(1,128)}', space=vmem, size = 0x12000, scoped, tag = 'internal scratch']
  %s0 = inlined_call_operand.hbm [shape: f32[16,128], index: 0, kind: input, shape index: {}, may-alias: {0,1}]
  %s1 = inlined_call_operand.hbm [shape: f32[16,128], index: 1, kind: output, shape index: {}, may-alias: {0,1}]
  %s2 = sld [smem:[#allocation0]]
  $region18: #{tpu_custom_call.1} parent=0
    _
  %s4 = ssub.s32 1, %s2
  %s5 = scalar_select 0, %s4, %s2
  $region1: #{tpu_custom_call.1} parent=0
    #allocation2 [shape = 'u8[8192]{0}', space=vmem, size = 0x2000, scoped, tag = 'input window, operand 0, single buffered']
    #allocation3 [shape = 's32[1]{0}', space=sflag, size = 0x4, scoped, tag = 'scoped memory for tpu_custom_call.1']
    #allocation4 [shape = 's32[1]{0}', space=sflag, size = 0x4, scoped, tag = 'scoped memory for tpu_custom_call.1']
    #allocation5 [shape = 'u8[8192]{0}', space=vmem, size = 0x2000, scoped, tag = 'output window, operand 0, single buffered']
    %6 = vsyncpa [#allocation3], 0
    %7 = vsyncpa [#allocation4], 0
    // Predicated region
    $region2: #{tpu_custom_call.1} parent=1 // pred_check
      _
    $region3: #{tpu_custom_call.1} parent=1 // pred_check_branch
      %9 = sbr.rel (0) target = $region5
    $region4: #{tpu_custom_call.1} parent=1 // pred_region
      %s11 = ssub.s32 256, 256
      %12 = vsyncadd [#allocation3], %s11
      %s13 = sshll.u32 [#allocation2], 4
      %s14 = int_to_ptr.vmem [resolvable:$true] %s13
      %19 = dma.hbm_to_vmem [thread:$0]  %s0, 256, %s14, [#allocation3], 128, 128, 8
    $region5: #{tpu_custom_call.1} parent=1 // pred_fallthru
      _
    // Predicated region
    $region6: #{tpu_custom_call.1} parent=1 // pred_check
      _
    $region7: #{tpu_custom_call.1} parent=1 // pred_check_branch
      %21 = sbr.rel (0) target = $region9
    $region8: #{tpu_custom_call.1} parent=1 // pred_region
      %22 = dma.done [#allocation3], 256
    $region9: #{tpu_custom_call.1} parent=1 // pred_fallthru
      _
    %v23 = vld [vmem:[#allocation2] sm:$0xff]
    %v24 = vld [vmem:[#allocation2 + $0x8] sm:$0xff]
    %25 = vst [vmem:[#allocation5] sm:$0xff] %v23
    %26 = vst [vmem:[#allocation5 + $0x8] sm:$0xff] %v24
    // Predicated region
    $region10: #{tpu_custom_call.1} parent=1 // pred_check
      _
    $region11: #{tpu_custom_call.1} parent=1 // pred_check_branch
      %28 = sbr.rel (0) target = $region13
    $region12: #{tpu_custom_call.1} parent=1 // pred_region
      %s30 = ssub.s32 256, 256
      %31 = vsyncadd [#allocation4], %s30
      %s32 = sshll.u32 [#allocation5], 4
      %s33 = int_to_ptr.vmem [resolvable:$true] %s32
      %38 = dma.vmem_to_hbm [thread:$0]  %s33, 256, %s1, [#allocation4], 128, 128, 8
    $region13: #{tpu_custom_call.1} parent=1 // pred_fallthru
      _
    // Predicated region
    $region14: #{tpu_custom_call.1} parent=1 // pred_check
      _
    $region15: #{tpu_custom_call.1} parent=1 // pred_check_branch
      %40 = sbr.rel (0) target = $region17
    $region16: #{tpu_custom_call.1} parent=1 // pred_region
      %41 = dma.done [#allocation4], 256
    $region17: #{tpu_custom_call.1} parent=1 // pred_fallthru
      _
    %42 = vsyncpa [#allocation3], 1
    %43 = vsyncpa [#allocation4], 1

</llo_original>
